<compile_context>
chip_gen: v7x
topology: tpu7x:2x2x1
jax: 0.10.0
libtpu: 0.0.40
codegen_flags: <defaults>
</compile_context>

<pallas_src>
import math
import functools

import jax
import jax.numpy as jnp
from jax.experimental import pallas as pl
from jax.experimental.pallas import tpu as pltpu

_LANES = 128
_MAX_BLOCK_ROWS = 2048  # 2048 x 128 x 4B = 1 MiB per block buffer


def _cosine_cutoff_kernel(d_ref, o_ref, *, cutoff_lower, cutoff_upper):
    d = d_ref[...]
    if cutoff_lower > 0:
        # pi * (2*(d - lo)/(hi - lo) + 1)  ==  d * K + C   (constants folded)
        k = 2.0 * math.pi / (cutoff_upper - cutoff_lower)
        c = math.pi * (1.0 - 2.0 * cutoff_lower / (cutoff_upper - cutoff_lower))
        cut = 0.5 * jnp.cos(d * k + c) + 0.5
        mask = (d > cutoff_lower) & (d < cutoff_upper)
    else:
        cut = 0.5 * jnp.cos(d * (math.pi / cutoff_upper)) + 0.5
        mask = d < cutoff_upper
    # single fused select instead of two mask multiplies + casts
    o_ref[...] = jnp.where(mask, cut, 0.0).astype(o_ref.dtype)


def _sublane_multiple(dtype):
    # minimum second-to-last tile dim per element width (f32:8, bf16:16, int8:32)
    return {4: 8, 2: 16, 1: 32}.get(jnp.dtype(dtype).itemsize, 8)


def cosine_cutoff(distances, cutoff_lower=0.0, cutoff_upper=5.0,
                  max_block_rows=_MAX_BLOCK_ROWS):
    """Elementwise cosine cutoff; matches CosineCutoff.forward semantics."""
    orig_shape = distances.shape
    dtype = distances.dtype
    flat = distances.reshape(-1)
    n = flat.shape[0]

    # Lane-dense [rows, 128] view. Pad only when N % 128 != 0 (minimal pad;
    # pad value sits above cutoff_upper so it would map to 0 even if kept).
    rem = n % _LANES
    padded = rem != 0
    if padded:
        flat = jnp.pad(flat, (0, _LANES - rem),
                       constant_values=cutoff_upper + 1.0)
    slab = flat.reshape(-1, _LANES)
    rows = slab.shape[0]

    sub = _sublane_multiple(dtype)
    if rows <= max_block_rows:
        # single grid step covering the whole slab (block == full array dims,
        # so no divisibility constraint applies)
        block_rows = rows
    else:
        block_rows = max(sub, (max_block_rows // sub) * sub)
    grid = pl.cdiv(rows, block_rows)

    kernel = functools.partial(
        _cosine_cutoff_kernel,
        cutoff_lower=float(cutoff_lower),
        cutoff_upper=float(cutoff_upper),
    )

    n_slab = rows * _LANES
    itemsize = jnp.dtype(dtype).itemsize
    cost = pl.CostEstimate(
        flops=6 * n_slab,                       # mul/add/cmp/select per element
        transcendentals=n_slab,                 # one cos per element
        bytes_accessed=2 * n_slab * itemsize,   # read N + write N
    )

    out = pl.pallas_call(
        kernel,
        out_shape=jax.ShapeDtypeStruct((rows, _LANES), dtype),
        grid_spec=pltpu.PrefetchScalarGridSpec(
            num_scalar_prefetch=0,
            grid=(grid,),
            in_specs=[pl.BlockSpec((block_rows, _LANES), lambda i: (i, 0))],
            out_specs=pl.BlockSpec((block_rows, _LANES), lambda i: (i, 0)),
        ),
        compiler_params=pltpu.CompilerParams(
            dimension_semantics=("parallel",),
        ),
        cost_estimate=cost,
    )(slab)

    flat_out = out.reshape(-1)
    if padded:
        flat_out = flat_out[:n]
    return flat_out.reshape(orig_shape)


def _reference(distances, cutoff_lower, cutoff_upper):
    if cutoff_lower > 0:
        c = 0.5 * (jnp.cos(math.pi * (2.0 * (distances - cutoff_lower)
                                      / (cutoff_upper - cutoff_lower) + 1.0)) + 1.0)
        c = c * (distances < cutoff_upper).astype(distances.dtype)
        c = c * (distances > cutoff_lower).astype(distances.dtype)
        return c
    else:
        c = 0.5 * (jnp.cos(distances * math.pi / cutoff_upper) + 1.0)
        c = c * (distances < cutoff_upper).astype(distances.dtype)
        return c


if __name__ == "__main__":
    key = jax.random.PRNGKey(0)

    # small synthetic set of edge distances in [0, 7) so both sides of the
    # cutoff are exercised; 2000 is not a multiple of 128 -> minimal-pad path,
    # single grid step.
    n_edges = 2000
    distances = jax.random.uniform(key, (n_edges,), dtype=jnp.float32,
                                   minval=0.0, maxval=7.0)

    # default-constructed module: cutoff_lower=0.0, cutoff_upper=5.0
    out0 = cosine_cutoff(distances, cutoff_lower=0.0, cutoff_upper=5.0)
    jax.block_until_ready(out0)
    ref0 = _reference(distances, 0.0, 5.0)
    assert out0.shape == distances.shape
    assert jnp.allclose(out0, ref0, atol=1e-5, rtol=1e-5)

    # cutoff_lower > 0 branch
    out1 = cosine_cutoff(distances, cutoff_lower=1.0, cutoff_upper=5.0)
    jax.block_until_ready(out1)
    ref1 = _reference(distances, 1.0, 5.0)
    assert jnp.allclose(out1, ref1, atol=1e-5, rtol=1e-5)

    # multiple-of-128 length (zero-copy reshape, no pad/slice) with a forced
    # small block so the multi-step "parallel" grid path is also exercised.
    d2 = jax.random.uniform(jax.random.fold_in(key, 1), (4096,),
                            dtype=jnp.float32, minval=0.0, maxval=7.0)
    out2 = cosine_cutoff(d2, cutoff_lower=0.0, cutoff_upper=5.0,
                         max_block_rows=8)
    jax.block_until_ready(out2)
    ref2 = _reference(d2, 0.0, 5.0)
    assert jnp.allclose(out2, ref2, atol=1e-5, rtol=1e-5)

    print("KERNEL_OK")
</pallas_src>

<mosaic_0001>
module attributes {stable_mosaic.version = 11 : i64} {
  func.func @_cosine_cutoff_kernel(%arg0: i32, %arg1: memref<16x128xf32, #tpu.memory_space<vmem>>, %arg2: memref<16x128xf32, #tpu.memory_space<vmem>>) attributes {dimension_semantics = [#tpu.dimension_semantics<parallel>], iteration_bounds = array<i64: 1>, scalar_prefetch = 0 : i64, scratch_operands = 0 : i64, tpu.core_type = #tpu.core_type<tc>, window_params = [{transform_indices = @transform_0, window_bounds = array<i64: 16, 128>}, {transform_indices = @transform_1, window_bounds = array<i64: 16, 128>}]} {
    %c0 = arith.constant 0 : index
    %c0_0 = arith.constant 0 : index
    %0 = vector.load %arg1[%c0, %c0_0] : memref<16x128xf32, #tpu.memory_space<vmem>>, vector<16x128xf32>
    %cst = arith.constant 0.628318548 : f32
    %1 = vector.broadcast %cst : f32 to vector<16x128xf32>
    %2 = arith.mulf %0, %1 : vector<16x128xf32>
    %3 = math.cos %2 : vector<16x128xf32>
    %cst_1 = arith.constant 5.000000e-01 : f32
    %4 = vector.broadcast %cst_1 : f32 to vector<16x128xf32>
    %5 = arith.mulf %4, %3 : vector<16x128xf32>
    %cst_2 = arith.constant 5.000000e-01 : f32
    %6 = vector.broadcast %cst_2 : f32 to vector<16x128xf32>
    %7 = arith.addf %5, %6 : vector<16x128xf32>
    %cst_3 = arith.constant 5.000000e+00 : f32
    %8 = vector.broadcast %cst_3 : f32 to vector<16x128xf32>
    %9 = arith.cmpf olt, %0, %8 : vector<16x128xf32>
    %cst_4 = arith.constant 0.000000e+00 : f32
    %10 = vector.broadcast %cst_4 : f32 to vector<16x128xf32>
    %11 = arith.select %9, %7, %10 : vector<16x128xi1>, vector<16x128xf32>
    %c0_5 = arith.constant 0 : index
    %c0_6 = arith.constant 0 : index
    %12 = vector.load %arg2[%c0_5, %c0_6] : memref<16x128xf32, #tpu.memory_space<vmem>>, vector<16x128xf32>
    tpu.vector_store %arg2[%c0_5, %c0_6], %11 {strides = array<i32>} : memref<16x128xf32, #tpu.memory_space<vmem>>, vector<16x128xf32>,
    return
  }
  func.func @transform_0(%arg0: i32) -> (i32, i32) {
    %c0_i32 = arith.constant 0 : i32
    %c0_i32_0 = arith.constant 0 : i32
    return %arg0, %c0_i32 : i32, i32
  }
  func.func @transform_1(%arg0: i32) -> (i32, i32) {
    %c0_i32 = arith.constant 0 : i32
    %c0_i32_0 = arith.constant 0 : i32
    return %arg0, %c0_i32 : i32, i32
  }
}

</mosaic_0001>

<llo_original>
// kernel: tpu_custom_call.1
$region0: #{tpu_custom_call.1}
  #allocation0 [shape = 'u32[]', space=smem, size = 0x4, offset = 0x4, fixed_abs, tag = 'smem constant byte address 0x4 - core index']
  #allocation1 [shape = 'u32[144,128]{1,0:T(1,128)}', space=vmem, size = 0x12000, scoped, tag = 'internal scratch']
  %s0 = inlined_call_operand.hbm [shape: f32[16,128], index: 0, kind: input, shape index: {}]
  %s1 = inlined_call_operand.hbm [shape: f32[16,128], index: 1, kind: output, shape index: {}]
  %s2 = sld [smem:[#allocation0]]
  $region18: #{tpu_custom_call.1} parent=0
    _
  %s4 = ssub.s32 1, %s2
  %s5 = scalar_select 0, %s4, %s2
  $region1: #{tpu_custom_call.1} parent=0
    #allocation2 [shape = 'u8[8192]{0}', space=vmem, size = 0x2000, scoped, tag = 'input window, operand 0, single buffered']
    #allocation3 [shape = 's32[1]{0}', space=sflag, size = 0x4, scoped, tag = 'scoped memory for tpu_custom_call.1']
    #allocation4 [shape = 's32[1]{0}', space=sflag, size = 0x4, scoped, tag = 'scoped memory for tpu_custom_call.1']
    #allocation5 [shape = 'u8[8192]{0}', space=vmem, size = 0x2000, scoped, tag = 'output window, operand 0, single buffered']
    %6 = vsyncpa [#allocation3], 0
    %7 = vsyncpa [#allocation4], 0
    // Predicated region
    $region2: #{tpu_custom_call.1} parent=1 // pred_check
      _
    $region3: #{tpu_custom_call.1} parent=1 // pred_check_branch
      %9 = sbr.rel (0) target = $region5
    $region4: #{tpu_custom_call.1} parent=1 // pred_region
      %s11 = ssub.s32 256, 256
      %12 = vsyncadd [#allocation3], %s11
      %s13 = sshll.u32 [#allocation2], 4
      %s14 = int_to_ptr.vmem [resolvable:$true] %s13
      %19 = dma.hbm_to_vmem [thread:$0]  %s0, 256, %s14, [#allocation3], 128, 128, 8
    $region5: #{tpu_custom_call.1} parent=1 // pred_fallthru
      _
    // Predicated region
    $region6: #{tpu_custom_call.1} parent=1 // pred_check
      _
    $region7: #{tpu_custom_call.1} parent=1 // pred_check_branch
      %21 = sbr.rel (0) target = $region9
    $region8: #{tpu_custom_call.1} parent=1 // pred_region
      %22 = dma.done [#allocation3], 256
    $region9: #{tpu_custom_call.1} parent=1 // pred_fallthru
      _
    %v23 = vld [vmem:[#allocation2] sm:$0xff]
    %v24 = vld [vmem:[#allocation2 + $0x8] sm:$0xff]
    %v25 = vmul.f32 %v23, 0.62831855
    %v26 = vmul.f32 %v24, 0.62831855
    %v27 = vand.u32 2147483647, %v25
    %vm28 = vcmp.le.f32.partialorder %v27, 0.7853982
    %vm29 = vcmp.lt.s32.totalorder %v25, 0
    %v30 = vand.u32 %v25, 2139095040
    %v31 = vshrl.u32 %v30, 23
    %v32 = vsub.s32 %v31, 127
    %v33 = vand.u32 2147483647, %v25
    %v34 = vand.u32 %v33, 8388607
    %v35 = vor.u32 %v34, 8388608
    %v36 = vsub.s32 0, %v35
    %v37 = vadd.s32 %v32, 1
    %vm38 = vcmp.gt.s32.totalorder %v37, 0
    %v39 = vsel %vm38, %v37, 0
    %v40 = vshrl.u32 %v39, 5
    %v41 = vand.u32 %v39, 31
    %v42 = vsub.s32 32, %v41
    %v43 = vshrl.u32 683565275, %v42
    %v44 = vshll.u32 683565275, %v41
    %v45 = vshrl.u32 2475754826, %v42
    %v46 = vor.u32 %v44, %v45
    %v47 = vshll.u32 2475754826, %v41
    %v48 = vshrl.u32 2131351028, %v42
    %v49 = vor.u32 %v47, %v48
    %v50 = vshll.u32 2131351028, %v41
    %v51 = vshrl.u32 2102212464, %v42
    %v52 = vor.u32 %v50, %v51
    %v53 = vshll.u32 2102212464, %v41
    %v54 = vshrl.u32 920167782, %v42
    %v55 = vor.u32 %v53, %v54
    %v56 = vshll.u32 920167782, %v41
    %v57 = vshrl.u32 1326507024, %v42
    %v58 = vor.u32 %v56, %v57
    %vm59 = vcmp.lt.s32.totalorder %v40, 1
    %vm60 = vcmp.lt.s32.totalorder %v40, 2
    %vm61 = vcmp.lt.s32.totalorder %v40, 3
    %vm62 = vcmp.lt.s32.totalorder %v40, 4
    %v63 = vsel %vm59, %v43, %v46
    %v64 = vsel %vm62, %v52, 2102212464
    %v65 = vsel %vm61, %v49, %v64
    %v66 = vsel %vm60, %v63, %v65
    %v67 = vsel %vm59, %v46, %v49
    %v68 = vsel %vm62, %v55, 920167782
    %v69 = vsel %vm61, %v52, %v68
    %v70 = vsel %vm60, %v67, %v69
    %v71 = vsel %vm59, %v49, %v52
    %v72 = vsel %vm62, %v58, 1326507024
    %v73 = vsel %vm61, %v55, %v72
    %v74 = vsel %vm60, %v71, %v73
    %v75 = vshll.u32 %v35, 8
    %v76 = vmul.u32.u64.compose %v75, %v74
    %v77 = vextract.low.u32 %v76
    %v78 = vextract.high.u32 %v76
    %v79 = vmul.u32.u64.compose %v75, %v70
    %v80 = vextract.low.u32 %v79
    %v81 = vextract.high.u32 %v79
    %v82 = vmul.u32 %v75, %v66
    %v83 = vadd.s32 %v78, %v80
    %vm84 = vc.u32 %v78, %v80
    %v85 = vadd.s32 %v81, 1
    %v86 = vsel %vm84, %v85, %v81
    %v87 = vadd.s32 %v82, %v86
    %v88 = vadd.s32 %v87, 536870912
    %v89 = vshrl.u32 %v88, 30
    %v90 = vshll.u32 %v89, 30
    %v91 = vsub.s32 %v87, %v90
    %vm92 = vcmp.lt.s32.totalorder %v91, 0
    %v93 = vsub.s32 0, %v91
    %v94 = vsel %vm92, %v93, %v91
    %v95 = vclz %v94
    %v96 = vsub.s32 %v95, 2
    %vm97 = vcmp.gt.s32.totalorder 0, %v96
    %v98 = vsel %vm97, 0, %v96
    %v99 = vsub.s32 32, %v98
    %v100 = vshll.u32 %v91, %v98
    %v101 = vshrl.u32 %v83, %v99
    %v102 = vor.u32 %v100, %v101
    %v103 = vsub.s32 4294967266, %v98
    %v104 = vadd.s32 %v103, 127
    %v105 = vshll.u32 %v104, 23
    %v106 = vor.u32 4788187, %v105
    %v107 = vand.u32 2147483647, %v106
    %v109 = vcvt.s32.f32 %v102
    %v110 = vmul.f32 %v109, %v107
    %v111 = vxor.u32 %v110, 2147483648
    %v112 = vsel %vm29, %v111, %v110
    %v113 = vsub.s32 4, %v89
    %v114 = vsel %vm29, %v113, %v89
    %v115 = vsel %vm28, %v25, %v112
    %v116 = vsel %vm28, 0, %v114
    %v117 = vcosq.f32.pop %v115
    %v118 = vsinq.f32.pop %v115
    %vm119 = vweird.f32 %v25
    %v120 = vand.u32 %v116, 3
    %vm121 = vcmp.lt.s32.totalorder %v120, 2
    %vm122 = vcmp.eq.s32.totalorder %v120, 0
    %v123 = vxor.u32 %v118, 2147483648
    %v124 = vsel %vm122, %v117, %v123
    %vm125 = vcmp.eq.s32.totalorder %v120, 2
    %v126 = vxor.u32 %v117, 2147483648
    %v127 = vsel %vm125, %v126, %v118
    %v128 = vsel %vm121, %v124, %v127
    %v129 = vsel %vm119, nan, %v128
    %v130 = vand.u32 2147483647, %v26
    %vm131 = vcmp.le.f32.partialorder %v130, 0.7853982
    %vm132 = vcmp.lt.s32.totalorder %v26, 0
    %v133 = vand.u32 %v26, 2139095040
    %v134 = vshrl.u32 %v133, 23
    %v135 = vsub.s32 %v134, 127
    %v136 = vand.u32 2147483647, %v26
    %v137 = vand.u32 %v136, 8388607
    %v138 = vor.u32 %v137, 8388608
    %v139 = vsub.s32 0, %v138
    %v140 = vadd.s32 %v135, 1
    %vm141 = vcmp.gt.s32.totalorder %v140, 0
    %v142 = vsel %vm141, %v140, 0
    %v143 = vshrl.u32 %v142, 5
    %v144 = vand.u32 %v142, 31
    %v145 = vsub.s32 32, %v144
    %v146 = vshrl.u32 683565275, %v145
    %v147 = vshll.u32 683565275, %v144
    %v148 = vshrl.u32 2475754826, %v145
    %v149 = vor.u32 %v147, %v148
    %v150 = vshll.u32 2475754826, %v144
    %v151 = vshrl.u32 2131351028, %v145
    %v152 = vor.u32 %v150, %v151
    %v153 = vshll.u32 2131351028, %v144
    %v154 = vshrl.u32 2102212464, %v145
    %v155 = vor.u32 %v153, %v154
    %v156 = vshll.u32 2102212464, %v144
    %v157 = vshrl.u32 920167782, %v145
    %v158 = vor.u32 %v156, %v157
    %v159 = vshll.u32 920167782, %v144
    %v160 = vshrl.u32 1326507024, %v145
    %v161 = vor.u32 %v159, %v160
    %vm162 = vcmp.lt.s32.totalorder %v143, 1
    %vm163 = vcmp.lt.s32.totalorder %v143, 2
    %vm164 = vcmp.lt.s32.totalorder %v143, 3
    %vm165 = vcmp.lt.s32.totalorder %v143, 4
    %v166 = vsel %vm162, %v146, %v149
    %v167 = vsel %vm165, %v155, 2102212464
    %v168 = vsel %vm164, %v152, %v167
    %v169 = vsel %vm163, %v166, %v168
    %v170 = vsel %vm162, %v149, %v152
    %v171 = vsel %vm165, %v158, 920167782
    %v172 = vsel %vm164, %v155, %v171
    %v173 = vsel %vm163, %v170, %v172
    %v174 = vsel %vm162, %v152, %v155
    %v175 = vsel %vm165, %v161, 1326507024
    %v176 = vsel %vm164, %v158, %v175
    %v177 = vsel %vm163, %v174, %v176
    %v178 = vshll.u32 %v138, 8
    %v179 = vmul.u32.u64.compose %v178, %v177
    %v180 = vextract.low.u32 %v179
    %v181 = vextract.high.u32 %v179
    %v182 = vmul.u32.u64.compose %v178, %v173
    %v183 = vextract.low.u32 %v182
    %v184 = vextract.high.u32 %v182
    %v185 = vmul.u32 %v178, %v169
    %v186 = vadd.s32 %v181, %v183
    %vm187 = vc.u32 %v181, %v183
    %v188 = vadd.s32 %v184, 1
    %v189 = vsel %vm187, %v188, %v184
    %v190 = vadd.s32 %v185, %v189
    %v191 = vadd.s32 %v190, 536870912
    %v192 = vshrl.u32 %v191, 30
    %v193 = vshll.u32 %v192, 30
    %v194 = vsub.s32 %v190, %v193
    %vm195 = vcmp.lt.s32.totalorder %v194, 0
    %v196 = vsub.s32 0, %v194
    %v197 = vsel %vm195, %v196, %v194
    %v198 = vclz %v197
    %v199 = vsub.s32 %v198, 2
    %vm200 = vcmp.gt.s32.totalorder 0, %v199
    %v201 = vsel %vm200, 0, %v199
    %v202 = vsub.s32 32, %v201
    %v203 = vshll.u32 %v194, %v201
    %v204 = vshrl.u32 %v186, %v202
    %v205 = vor.u32 %v203, %v204
    %v206 = vsub.s32 4294967266, %v201
    %v207 = vadd.s32 %v206, 127
    %v208 = vshll.u32 %v207, 23
    %v209 = vor.u32 4788187, %v208
    %v210 = vand.u32 2147483647, %v209
    %v212 = vcvt.s32.f32 %v205
    %v213 = vmul.f32 %v212, %v210
    %v214 = vxor.u32 %v213, 2147483648
    %v215 = vsel %vm132, %v214, %v213
    %v216 = vsub.s32 4, %v192
    %v217 = vsel %vm132, %v216, %v192
    %v218 = vsel %vm131, %v26, %v215
    %v219 = vsel %vm131, 0, %v217
    %v220 = vcosq.f32.pop %v218
    %v221 = vsinq.f32.pop %v218
    %vm222 = vweird.f32 %v26
    %v223 = vand.u32 %v219, 3
    %vm224 = vcmp.lt.s32.totalorder %v223, 2
    %vm225 = vcmp.eq.s32.totalorder %v223, 0
    %v226 = vxor.u32 %v221, 2147483648
    %v227 = vsel %vm225, %v220, %v226
    %vm228 = vcmp.eq.s32.totalorder %v223, 2
    %v229 = vxor.u32 %v220, 2147483648
    %v230 = vsel %vm228, %v229, %v221
    %v231 = vsel %vm224, %v227, %v230
    %v232 = vsel %vm222, nan, %v231
    %v233 = vmul.f32 %v129, 0.5
    %v234 = vmul.f32 %v232, 0.5
    %v235 = vadd.f32 %v233, 0.5
    %v236 = vadd.f32 %v234, 0.5
    %vm237 = vcmp.lt.f32.partialorder %v23, 5.0
    %vm238 = vcmp.lt.f32.partialorder %v24, 5.0
    %v239 = vsel %vm237, %v235, 0.0
    %v240 = vsel %vm238, %v236, 0.0
    %241 = vst [vmem:[#allocation5] sm:$0xff] %v239
    %242 = vst [vmem:[#allocation5 + $0x8] sm:$0xff] %v240
    // Predicated region
    $region10: #{tpu_custom_call.1} parent=1 // pred_check
      _
    $region11: #{tpu_custom_call.1} parent=1 // pred_check_branch
      %244 = sbr.rel (0) target = $region13
    $region12: #{tpu_custom_call.1} parent=1 // pred_region
      %s246 = ssub.s32 256, 256
      %247 = vsyncadd [#allocation4], %s246
      %s248 = sshll.u32 [#allocation5], 4
      %s249 = int_to_ptr.vmem [resolvable:$true] %s248
      %254 = dma.vmem_to_hbm [thread:$0]  %s249, 256, %s1, [#allocation4], 128, 128, 8
    $region13: #{tpu_custom_call.1} parent=1 // pred_fallthru
      _
    // Predicated region
    $region14: #{tpu_custom_call.1} parent=1 // pred_check
      _
    $region15: #{tpu_custom_call.1} parent=1 // pred_check_branch
      %256 = sbr.rel (0) target = $region17
    $region16: #{tpu_custom_call.1} parent=1 // pred_region
      %257 = dma.done [#allocation4], 256
    $region17: #{tpu_custom_call.1} parent=1 // pred_fallthru
      _
    %258 = vsyncpa [#allocation3], 1
    %259 = vsyncpa [#allocation4], 1

</llo_original>
